<compile_context>
chip_gen: v6e
topology: v6e:2x2x1
jax: 0.10.0
libtpu: 0.0.40
codegen_flags: <defaults>
</compile_context>

<pallas_src>
import functools

import jax
import jax.numpy as jnp
from jax.experimental import pallas as pl
from jax.experimental.pallas import tpu as pltpu

STATE_DIM = 17
ACTION_DIM = 6
HIDDEN = 256
OUT_PAD = 128          # lane-dense padded width of the mean head (>= ACTION_DIM)
MAX_TILE_B = 1024      # batch rows per grid step (multiple of 16)


def _round_up(n, m):
    return ((n + m - 1) // m) * m


def _cdiv(a, b):
    return -(-a // b)


def _choose_tiling(B):
    """Bucketed padded batch size + balanced per-step tile (trace-time ints)."""
    # Bucket to a bounded set of padded sizes (<= ~25% slack) -> few recompiles.
    pow2 = max(16, 1 << (max(B, 1) - 1).bit_length())
    quantum = max(16, pow2 // 4)
    Bp = _round_up(B, quantum)
    # Enough grid steps to keep tiles <= MAX_TILE_B; >= 2 steps once the batch
    # is big enough so the "parallel" axis shards across both v7x TensorCores.
    n_tiles = _cdiv(Bp, MAX_TILE_B)
    if Bp >= 32:
        n_tiles = max(n_tiles, 2)
    # Balance the tail: split Bp as evenly as possible in multiples of 16 rows
    # (bf16 packs 16 sublanes/vreg) instead of always using MAX_TILE_B.
    tile_b = _round_up(_cdiv(Bp, n_tiles), 16)
    Bp = tile_b * n_tiles
    return Bp, tile_b


def policy_kernel(x_ref, w1_ref, b1_ref, w2_ref, b2_ref, wm_ref, bm_ref,
                  mean_ref):
    # fc1 + relu   (bf16 MXU inputs, f32 accumulation, f32 elementwise)
    h = jnp.dot(x_ref[...].astype(jnp.bfloat16), w1_ref[...],
                preferred_element_type=jnp.float32)
    h = jnp.maximum(h + b1_ref[...], 0.0)
    # fc2 + relu
    h = jnp.dot(h.astype(jnp.bfloat16), w2_ref[...],
                preferred_element_type=jnp.float32)
    h = jnp.maximum(h + b2_ref[...], 0.0)
    # mean head (padded to OUT_PAD lanes -> unmasked, lane-dense bf16 store)
    m = jnp.dot(h.astype(jnp.bfloat16), wm_ref[...],
                preferred_element_type=jnp.float32)
    mean_ref[...] = (m + bm_ref[...]).astype(mean_ref.dtype)


def prepare_params(params):
    """One-time conversion of PyTorch-layout params into kernel-ready form.

    Done once (outside the per-call path): bf16 weights, lane-padded mean head,
    (1, H) f32 biases, and the x-independent std.
    """
    w1, b1, w2, b2, wm, bm, log_std = params
    wm_pad = jnp.zeros((HIDDEN, OUT_PAD), jnp.bfloat16).at[:, :ACTION_DIM].set(
        wm.astype(jnp.bfloat16))
    bm_pad = jnp.zeros((1, OUT_PAD), jnp.float32).at[:, :ACTION_DIM].set(bm)
    return {
        "w1": w1.astype(jnp.bfloat16),
        "b1": b1.reshape(1, HIDDEN).astype(jnp.float32),
        "w2": w2.astype(jnp.bfloat16),
        "b2": b2.reshape(1, HIDDEN).astype(jnp.float32),
        "wm": wm_pad,
        "bm": bm_pad,
        "std": jnp.exp(jnp.clip(log_std, -20.0, 2.0)),
    }


@functools.partial(jax.jit, static_argnames=("tile_b",))
def _policy_forward_padded(x, kp, *, tile_b):
    """x: (Bp, STATE_DIM) f32 with Bp a multiple of tile_b. Returns (Bp, OUT_PAD) bf16."""
    Bp = x.shape[0]
    grid = (Bp // tile_b,)

    def resident(shape):
        # Weight / bias block that stays the same for every batch tile.
        return pl.BlockSpec(shape, lambda i: (0, 0))

    cost = pl.CostEstimate(
        flops=2 * Bp * (STATE_DIM * HIDDEN + HIDDEN * HIDDEN + HIDDEN * OUT_PAD),
        transcendentals=0,
        bytes_accessed=(x.size * 4
                        + (kp["w1"].size + kp["w2"].size + kp["wm"].size) * 2
                        + (kp["b1"].size + kp["b2"].size + kp["bm"].size) * 4
                        + Bp * OUT_PAD * 2),
    )

    return pl.pallas_call(
        policy_kernel,
        out_shape=jax.ShapeDtypeStruct((Bp, OUT_PAD), jnp.bfloat16),
        grid_spec=pltpu.PrefetchScalarGridSpec(
            num_scalar_prefetch=0,
            grid=grid,
            in_specs=[
                pl.BlockSpec((tile_b, STATE_DIM), lambda i: (i, 0)),  # x
                resident((STATE_DIM, HIDDEN)),                        # w1 (bf16)
                resident((1, HIDDEN)),                                # b1
                resident((HIDDEN, HIDDEN)),                           # w2 (bf16)
                resident((1, HIDDEN)),                                # b2
                resident((HIDDEN, OUT_PAD)),                          # wm (padded bf16)
                resident((1, OUT_PAD)),                               # bm (padded)
            ],
            out_specs=pl.BlockSpec((tile_b, OUT_PAD), lambda i: (i, 0)),
        ),
        compiler_params=pltpu.CompilerParams(
            dimension_semantics=("parallel",),
            vmem_limit_bytes=32 * 1024 * 1024,
        ),
        cost_estimate=cost,
    )(x, kp["w1"], kp["b1"], kp["w2"], kp["b2"], kp["wm"], kp["bm"])


def policy_forward(x, kparams):
    """x: (B, STATE_DIM) f32; kparams from prepare_params().

    Returns (mean (B, ACTION_DIM) f32, std (ACTION_DIM,) f32).
    Not jitted: batch bucketing / padding happens here so the compiled kernel
    set stays small for variable RL batch sizes.
    """
    B = x.shape[0]
    Bp, tile_b = _choose_tiling(B)
    if Bp != B:
        x = jnp.pad(x, ((0, Bp - B), (0, 0)))
    mean_pad = _policy_forward_padded(x, kparams, tile_b=tile_b)
    mean = mean_pad[:B, :ACTION_DIM].astype(jnp.float32)
    return mean, kparams["std"]


def init_params(key):
    """Deterministic parameter init matching the PyTorch module's shapes.

    nn.Linear default init: U(-1/sqrt(fan_in), 1/sqrt(fan_in)) for W and b.
    Weights stored transposed, i.e. (in, out).
    """
    ks = jax.random.split(key, 6)

    def linear(kw, kb, fan_in, fan_out):
        bound = 1.0 / jnp.sqrt(fan_in)
        w = jax.random.uniform(kw, (fan_in, fan_out), jnp.float32, -bound, bound)
        b = jax.random.uniform(kb, (fan_out,), jnp.float32, -bound, bound)
        return w, b

    w1, b1 = linear(ks[0], ks[1], STATE_DIM, HIDDEN)
    w2, b2 = linear(ks[2], ks[3], HIDDEN, HIDDEN)
    wm, bm = linear(ks[4], ks[5], HIDDEN, ACTION_DIM)
    log_std = jnp.zeros((ACTION_DIM,), jnp.float32)  # nn.Parameter(torch.zeros(action_dim))
    return (w1, b1, w2, b2, wm, bm, log_std)


def reference_forward(x, params):
    """Pure-JAX reference matching the kernel's bf16-weight / f32-accumulate math."""
    w1, b1, w2, b2, wm, bm, log_std = params

    def dot_bf16(a, w):
        return jnp.dot(a.astype(jnp.bfloat16), w.astype(jnp.bfloat16),
                       preferred_element_type=jnp.float32)

    h = jax.nn.relu(dot_bf16(x, w1) + b1)
    h = jax.nn.relu(dot_bf16(h, w2) + b2)
    mean = dot_bf16(h, wm) + bm
    std = jnp.exp(jnp.clip(log_std, -20.0, 2.0))
    return mean, std


if __name__ == "__main__":
    key = jax.random.PRNGKey(0)
    kp, kx = jax.random.split(key)

    params = init_params(kp)
    kparams = prepare_params(params)     # one-time kernel-ready conversion

    batch = 8
    x = jax.random.normal(kx, (batch, STATE_DIM), jnp.float32)

    mean, std = policy_forward(x, kparams)
    mean, std = jax.block_until_ready((mean, std))

    ref_mean, ref_std = reference_forward(x, params)
    assert mean.shape == (batch, ACTION_DIM)
    assert std.shape == (ACTION_DIM,)
    # Tolerance covers the bf16 rounding of the lane-dense output store.
    assert jnp.allclose(mean, ref_mean, atol=1e-2, rtol=1e-2)
    assert jnp.allclose(std, ref_std, atol=1e-6, rtol=1e-6)

    print("KERNEL_OK")
</pallas_src>

<mosaic_0001>
module attributes {stable_mosaic.version = 11 : i64} {
  func.func @policy_kernel(%arg0: i32, %arg1: memref<16x17xf32, #tpu.memory_space<vmem>>, %arg2: memref<17x256xbf16, #tpu.memory_space<vmem>>, %arg3: memref<1x256xf32, #tpu.memory_space<vmem>>, %arg4: memref<256x256xbf16, #tpu.memory_space<vmem>>, %arg5: memref<1x256xf32, #tpu.memory_space<vmem>>, %arg6: memref<256x128xbf16, #tpu.memory_space<vmem>>, %arg7: memref<1x128xf32, #tpu.memory_space<vmem>>, %arg8: memref<16x128xbf16, #tpu.memory_space<vmem>>) attributes {dimension_semantics = [#tpu.dimension_semantics<parallel>], iteration_bounds = array<i64: 1>, scalar_prefetch = 0 : i64, scratch_operands = 0 : i64, tpu.core_type = #tpu.core_type<tc>, window_params = [{transform_indices = @transform_0, window_bounds = array<i64: 16, 17>}, {pipeline_mode = #tpu.pipeline_mode<synchronous>, transform_indices = @transform_1, window_bounds = array<i64: 17, 256>}, {pipeline_mode = #tpu.pipeline_mode<synchronous>, transform_indices = @transform_2, window_bounds = array<i64: 1, 256>}, {pipeline_mode = #tpu.pipeline_mode<synchronous>, transform_indices = @transform_3, window_bounds = array<i64: 256, 256>}, {pipeline_mode = #tpu.pipeline_mode<synchronous>, transform_indices = @transform_4, window_bounds = array<i64: 1, 256>}, {pipeline_mode = #tpu.pipeline_mode<synchronous>, transform_indices = @transform_5, window_bounds = array<i64: 256, 128>}, {pipeline_mode = #tpu.pipeline_mode<synchronous>, transform_indices = @transform_6, window_bounds = array<i64: 1, 128>}, {transform_indices = @transform_7, window_bounds = array<i64: 16, 128>}]} {
    %c0 = arith.constant 0 : index
    %c0_0 = arith.constant 0 : index
    %0 = vector.load %arg1[%c0, %c0_0] : memref<16x17xf32, #tpu.memory_space<vmem>>, vector<16x17xf32>
    %1 = arith.truncf %0 : vector<16x17xf32> to vector<16x17xbf16>
    %c0_1 = arith.constant 0 : index
    %c0_2 = arith.constant 0 : index
    %2 = vector.load %arg2[%c0_1, %c0_2] : memref<17x256xbf16, #tpu.memory_space<vmem>>, vector<17x256xbf16>
    %cst = arith.constant dense<0.000000e+00> : vector<16x256xf32>
    %3 = tpu.matmul %1, %2, %cst {dimension_numbers = #tpu.dot_dimension_numbers<[1], [0], [0], [1], [0, 0, 1, 1], [], []>} : vector<16x17xbf16>, vector<17x256xbf16>, vector<16x256xf32> -> vector<16x256xf32>
    %c0_3 = arith.constant 0 : index
    %c0_4 = arith.constant 0 : index
    %4 = vector.load %arg3[%c0_3, %c0_4] : memref<1x256xf32, #tpu.memory_space<vmem>>, vector<1x256xf32>
    %5 = vector.broadcast %4 : vector<1x256xf32> to vector<16x256xf32>
    %6 = arith.addf %3, %5 : vector<16x256xf32>
    %cst_5 = arith.constant 0.000000e+00 : f32
    %7 = vector.broadcast %cst_5 : f32 to vector<16x256xf32>
    %8 = arith.maximumf %6, %7 : vector<16x256xf32>
    %9 = arith.truncf %8 : vector<16x256xf32> to vector<16x256xbf16>
    %c0_6 = arith.constant 0 : index
    %c0_7 = arith.constant 0 : index
    %10 = vector.load %arg4[%c0_6, %c0_7] : memref<256x256xbf16, #tpu.memory_space<vmem>>, vector<256x256xbf16>
    %cst_8 = arith.constant dense<0.000000e+00> : vector<16x256xf32>
    %11 = tpu.matmul %9, %10, %cst_8 {dimension_numbers = #tpu.dot_dimension_numbers<[1], [0], [0], [1], [0, 0, 1, 1], [], []>} : vector<16x256xbf16>, vector<256x256xbf16>, vector<16x256xf32> -> vector<16x256xf32>
    %c0_9 = arith.constant 0 : index
    %c0_10 = arith.constant 0 : index
    %12 = vector.load %arg5[%c0_9, %c0_10] : memref<1x256xf32, #tpu.memory_space<vmem>>, vector<1x256xf32>
    %13 = vector.broadcast %12 : vector<1x256xf32> to vector<16x256xf32>
    %14 = arith.addf %11, %13 : vector<16x256xf32>
    %cst_11 = arith.constant 0.000000e+00 : f32
    %15 = vector.broadcast %cst_11 : f32 to vector<16x256xf32>
    %16 = arith.maximumf %14, %15 : vector<16x256xf32>
    %17 = arith.truncf %16 : vector<16x256xf32> to vector<16x256xbf16>
    %c0_12 = arith.constant 0 : index
    %c0_13 = arith.constant 0 : index
    %18 = vector.load %arg6[%c0_12, %c0_13] : memref<256x128xbf16, #tpu.memory_space<vmem>>, vector<256x128xbf16>
    %cst_14 = arith.constant dense<0.000000e+00> : vector<16x128xf32>
    %19 = tpu.matmul %17, %18, %cst_14 {dimension_numbers = #tpu.dot_dimension_numbers<[1], [0], [0], [1], [0, 0, 1, 1], [], []>} : vector<16x256xbf16>, vector<256x128xbf16>, vector<16x128xf32> -> vector<16x128xf32>
    %c0_15 = arith.constant 0 : index
    %c0_16 = arith.constant 0 : index
    %20 = vector.load %arg7[%c0_15, %c0_16] : memref<1x128xf32, #tpu.memory_space<vmem>>, vector<1x128xf32>
    %21 = vector.broadcast %20 : vector<1x128xf32> to vector<16x128xf32>
    %22 = arith.addf %19, %21 : vector<16x128xf32>
    %23 = arith.truncf %22 : vector<16x128xf32> to vector<16x128xbf16>
    %c0_17 = arith.constant 0 : index
    %c0_18 = arith.constant 0 : index
    %24 = vector.load %arg8[%c0_17, %c0_18] : memref<16x128xbf16, #tpu.memory_space<vmem>>, vector<16x128xbf16>
    tpu.vector_store %arg8[%c0_17, %c0_18], %23 {strides = array<i32>} : memref<16x128xbf16, #tpu.memory_space<vmem>>, vector<16x128xbf16>,
    return
  }
  func.func @transform_0(%arg0: i32) -> (i32, i32) {
    %c0_i32 = arith.constant 0 : i32
    %c0_i32_0 = arith.constant 0 : i32
    return %arg0, %c0_i32 : i32, i32
  }
  func.func @transform_1(%arg0: i32) -> (i32, i32) {
    %c0_i32 = arith.constant 0 : i32
    %c0_i32_0 = arith.constant 0 : i32
    %c0_i32_1 = arith.constant 0 : i32
    return %c0_i32, %c0_i32_0 : i32, i32
  }
  func.func @transform_2(%arg0: i32) -> (i32, i32) {
    %c0_i32 = arith.constant 0 : i32
    %c0_i32_0 = arith.constant 0 : i32
    %c0_i32_1 = arith.constant 0 : i32
    return %c0_i32, %c0_i32_0 : i32, i32
  }
  func.func @transform_3(%arg0: i32) -> (i32, i32) {
    %c0_i32 = arith.constant 0 : i32
    %c0_i32_0 = arith.constant 0 : i32
    %c0_i32_1 = arith.constant 0 : i32
    return %c0_i32, %c0_i32_0 : i32, i32
  }
  func.func @transform_4(%arg0: i32) -> (i32, i32) {
    %c0_i32 = arith.constant 0 : i32
    %c0_i32_0 = arith.constant 0 : i32
    %c0_i32_1 = arith.constant 0 : i32
    return %c0_i32, %c0_i32_0 : i32, i32
  }
  func.func @transform_5(%arg0: i32) -> (i32, i32) {
    %c0_i32 = arith.constant 0 : i32
    %c0_i32_0 = arith.constant 0 : i32
    %c0_i32_1 = arith.constant 0 : i32
    return %c0_i32, %c0_i32_0 : i32, i32
  }
  func.func @transform_6(%arg0: i32) -> (i32, i32) {
    %c0_i32 = arith.constant 0 : i32
    %c0_i32_0 = arith.constant 0 : i32
    %c0_i32_1 = arith.constant 0 : i32
    return %c0_i32, %c0_i32_0 : i32, i32
  }
  func.func @transform_7(%arg0: i32) -> (i32, i32) {
    %c0_i32 = arith.constant 0 : i32
    %c0_i32_0 = arith.constant 0 : i32
    return %arg0, %c0_i32 : i32, i32
  }
}

</mosaic_0001>

<llo_original>
// kernel: _policy_forward_padded.1
$region0: #{_policy_forward_padded.1}
  #allocation0 [shape = 'u32[]', space=smem, size = 0x4, offset = 0x4, fixed_abs, tag = 'smem constant byte address 0x4 - core index']
  #allocation1 [shape = 'u32[144,128]{1,0:T(1,128)}', space=vmem, size = 0x12000, scoped, tag = 'internal scratch']
  %s0 = inlined_call_operand.hbm [shape: f32[16,17], index: 0, kind: input, shape index: {}]
  %s1 = inlined_call_operand.hbm [shape: bf16[17,256], index: 1, kind: input, shape index: {}]
  %s2 = inlined_call_operand.hbm [shape: f32[1,256], index: 2, kind: input, shape index: {}]
  %s3 = inlined_call_operand.hbm [shape: bf16[256,256], index: 3, kind: input, shape index: {}]
  %s4 = inlined_call_operand.vmem [shape: f32[1,256], index: 4, kind: input, shape index: {}]
  %s5 = inlined_call_operand.hbm [shape: bf16[256,128], index: 5, kind: input, shape index: {}]
  %s6 = inlined_call_operand.vmem [shape: f32[1,128], index: 6, kind: input, shape index: {}]
  %s7 = inlined_call_operand.hbm [shape: bf16[16,128], index: 7, kind: output, shape index: {}]
  %s8 = sld [smem:[#allocation0]]
  $region58: #{_policy_forward_padded.1} parent=0
    _
  %s10 = ssub.s32 1, %s8
  %s11 = scalar_select 0, %s10, %s8
  $region1: #{_policy_forward_padded.1} parent=0
    #allocation2 [shape = 'u8[8192]{0}', space=vmem, size = 0x2000, scoped, tag = 'input window, operand 0, single buffered']
    #allocation3 [shape = 's32[1]{0}', space=sflag, size = 0x4, scoped, tag = 'scoped memory for _policy_forward_padded.1']
    #allocation4 [shape = 's32[1]{0}', space=sflag, size = 0x4, scoped, tag = 'scoped memory for _policy_forward_padded.1']
    #allocation5 [shape = 'u8[12288]{0}', space=vmem, size = 0x3000, scoped, tag = 'input window, operand 1, single buffered']
    #allocation6 [shape = 's32[1]{0}', space=sflag, size = 0x4, scoped, tag = 'scoped memory for _policy_forward_padded.1']
    #allocation7 [shape = 'u8[1024]{0}', space=vmem, size = 0x400, scoped, tag = 'input window, operand 2, single buffered']
    #allocation8 [shape = 'u8[131072]{0}', space=vmem, size = 0x20000, scoped, tag = 'input window, operand 3, single buffered']
    #allocation9 [shape = 's32[1]{0}', space=sflag, size = 0x4, scoped, tag = 'scoped memory for _policy_forward_padded.1']
    #allocation10 [shape = 'u8[65536]{0}', space=vmem, size = 0x10000, scoped, tag = 'input window, operand 5, single buffered']
    #allocation11 [shape = 'u8[4096]{0}', space=vmem, size = 0x1000, scoped, tag = 'output window, operand 0, single buffered']
    %12 = vsyncpa [#allocation3], 0
    %13 = vsyncpa [#allocation6], 0
    %14 = vsyncpa [#allocation9], 0
    %15 = vsyncpa [#allocation4], 0
    // Predicated region
    $region2: #{_policy_forward_padded.1} parent=1 // pred_check
      _
    $region3: #{_policy_forward_padded.1} parent=1 // pred_check_branch
      %17 = sbr.rel (0) target = $region5
    $region4: #{_policy_forward_padded.1} parent=1 // pred_region
      %s19 = ssub.s32 256, 256
      %20 = vsyncadd [#allocation3], %s19
      %s21 = sshll.u32 [#allocation2], 4
      %s22 = int_to_ptr.vmem [resolvable:$true] %s21
      %27 = dma.hbm_to_vmem [thread:$0]  %s0, 256, %s22, [#allocation3], 128, 128, 8
    $region5: #{_policy_forward_padded.1} parent=1 // pred_fallthru
      _
    // Predicated region
    $region6: #{_policy_forward_padded.1} parent=1 // pred_check
      _
    $region7: #{_policy_forward_padded.1} parent=1 // pred_check_branch
      %29 = sbr.rel (0) target = $region9
    $region8: #{_policy_forward_padded.1} parent=1 // pred_region
      %s31 = ssub.s32 384, 384
      %32 = vsyncadd [#allocation6], %s31
      %s33 = sshll.u32 [#allocation5], 4
      %s34 = int_to_ptr.vmem [resolvable:$true] %s33
      %39 = dma.hbm_to_vmem [thread:$0]  %s1, 384, %s34, [#allocation6], 128, 128, 8
    $region9: #{_policy_forward_padded.1} parent=1 // pred_fallthru
      _
    // Predicated region
    $region10: #{_policy_forward_padded.1} parent=1 // pred_check
      _
    $region11: #{_policy_forward_padded.1} parent=1 // pred_check_branch
      %41 = sbr.rel (0) target = $region13
    $region12: #{_policy_forward_padded.1} parent=1 // pred_region
      %s43 = ssub.s32 32, 32
      %44 = vsyncadd [#allocation6], %s43
      %s46 = sshll.u32 [#allocation7], 4
      %s47 = int_to_ptr.vmem [resolvable:$true] %s46
      %49 = dma.hbm_to_vmem [thread:$0]  %s2, 32, %s47, [#allocation6]
    $region13: #{_policy_forward_padded.1} parent=1 // pred_fallthru
      _
    // Predicated region
    $region14: #{_policy_forward_padded.1} parent=1 // pred_check
      _
    $region15: #{_policy_forward_padded.1} parent=1 // pred_check_branch
      %51 = sbr.rel (0) target = $region17
    $region16: #{_policy_forward_padded.1} parent=1 // pred_region
      %s53 = ssub.s32 4096, 4096
      %54 = vsyncadd [#allocation9], %s53
      %s55 = sshll.u32 [#allocation8], 4
      %s56 = int_to_ptr.vmem [resolvable:$true] %s55
      %61 = dma.hbm_to_vmem [thread:$0]  %s3, 4096, %s56, [#allocation9], 128, 128, 8
    $region17: #{_policy_forward_padded.1} parent=1 // pred_fallthru
      _
    // Predicated region
    $region18: #{_policy_forward_padded.1} parent=1 // pred_check
      _
    $region19: #{_policy_forward_padded.1} parent=1 // pred_check_branch
      %63 = sbr.rel (0) target = $region21
    $region20: #{_policy_forward_padded.1} parent=1 // pred_region
      _
    $region21: #{_policy_forward_padded.1} parent=1 // pred_fallthru
      _
    // Predicated region
    $region22: #{_policy_forward_padded.1} parent=1 // pred_check
      _
    $region23: #{_policy_forward_padded.1} parent=1 // pred_check_branch
      %65 = sbr.rel (0) target = $region25
    $region24: #{_policy_forward_padded.1} parent=1 // pred_region
      %s67 = ssub.s32 2048, 2048
      %68 = vsyncadd [#allocation9], %s67
      %s69 = sshll.u32 [#allocation10], 4
      %s70 = int_to_ptr.vmem [resolvable:$true] %s69
      %75 = dma.hbm_to_vmem [thread:$0]  %s5, 2048, %s70, [#allocation9], 64, 64, 4
    $region25: #{_policy_forward_padded.1} parent=1 // pred_fallthru
      _
    // Predicated region
    $region26: #{_policy_forward_padded.1} parent=1 // pred_check
      _
    $region27: #{_policy_forward_padded.1} parent=1 // pred_check_branch
      %77 = sbr.rel (0) target = $region29
    $region28: #{_policy_forward_padded.1} parent=1 // pred_region
      _
    $region29: #{_policy_forward_padded.1} parent=1 // pred_fallthru
      _
    // Predicated region
    $region30: #{_policy_forward_padded.1} parent=1 // pred_check
      _
    $region31: #{_policy_forward_padded.1} parent=1 // pred_check_branch
      %79 = sbr.rel (0) target = $region33
    $region32: #{_policy_forward_padded.1} parent=1 // pred_region
      %80 = dma.done [#allocation3], 256
    $region33: #{_policy_forward_padded.1} parent=1 // pred_fallthru
      _
    // Predicated region
    $region34: #{_policy_forward_padded.1} parent=1 // pred_check
      _
    $region35: #{_policy_forward_padded.1} parent=1 // pred_check_branch
      %82 = sbr.rel (0) target = $region37
    $region36: #{_policy_forward_padded.1} parent=1 // pred_region
      %83 = dma.done [#allocation6], 384
    $region37: #{_policy_forward_padded.1} parent=1 // pred_fallthru
      _
    // Predicated region
    $region38: #{_policy_forward_padded.1} parent=1 // pred_check
      _
    $region39: #{_policy_forward_padded.1} parent=1 // pred_check_branch
      %85 = sbr.rel (0) target = $region41
    $region40: #{_policy_forward_padded.1} parent=1 // pred_region
      %86 = dma.done [#allocation6], 32
    $region41: #{_policy_forward_padded.1} parent=1 // pred_fallthru
      _
    // Predicated region
    $region42: #{_policy_forward_padded.1} parent=1 // pred_check
      _
    $region43: #{_policy_forward_padded.1} parent=1 // pred_check_branch
      %88 = sbr.rel (0) target = $region45
    $region44: #{_policy_forward_padded.1} parent=1 // pred_region
      %89 = dma.done [#allocation9], 4096
    $region45: #{_policy_forward_padded.1} parent=1 // pred_fallthru
      _
    // Predicated region
    $region46: #{_policy_forward_padded.1} parent=1 // pred_check
      _
    $region47: #{_policy_forward_padded.1} parent=1 // pred_check_branch
      %91 = sbr.rel (0) target = $region49
    $region48: #{_policy_forward_padded.1} parent=1 // pred_region
      %92 = dma.done [#allocation9], 2048
    $region49: #{_policy_forward_padded.1} parent=1 // pred_fallthru
      _
    %v94 = vld [vmem:[#allocation2] sm:$0xff]
    %v95 = vld [vmem:[#allocation2 + $0x8] sm:$0xff]
    %v96 = vpack.c.bf16 %v95, %v94
    %v97 = vld [vmem:[#allocation5] sm:$0xff]
    %v98 = vld [vmem:[#allocation5 + $0x8] sm:$0xff]
    %v99 = vld [vmem:[#allocation5 + $0x10] sm:$0x11]
    %v100 = vld [vmem:[#allocation7] sm:$0x3]
    %v102 = vlaneseq
    %v103 = vshrl.u32 %v102, 7
    %v104 = vsub.s32 0, %v103
    %v105 = vrot.slane %v100, %v104
    %v106 = vlaneseq
    %v107 = vshrl.u32 %v106, 7
    %v108 = vsub.s32 1, %v107
    %v109 = vrot.slane %v100, %v108
    %v115 = vunpack.c.l.b16 %v97
    %v116 = vunpack.c.h.b16 %v97
    %v117 = vunpack.c.l.b16 %v98
    %v118 = vunpack.c.h.b16 %v98
    %v119 = vunpack.c.l.b16 %v99
    %v120 = vunpack.c.h.b16 %v99
    %v121 = vpack.c.b16 %v117, %v115
    %v122 = vpack.c.b16 %v118, %v116
    %v123 = vpack.c.b16 %v119, %v119
    %v124 = vpack.c.b16 %v120, %v120
    %vm127 = vcmask 138240
    %v129 = vsel %vm127, %v96, 0
    %vm131 = vcmask 1040384
    %v132 = vsel 0, 4294967295, 65535
    %v133 = vsel %vm131, %v132, 0
    %v135 = vand.u32 %v123, %v133
    %v138 = vand.u32 %v124, %v133
    %140 = vmatprep.subr.bf16.mxu0 0
    %141 = vmatpush1.bf16.msra.mxu0 0
    %142 = vmatprep.subr.bf16.mxu0 0
    %143 = vmatpush1.bf16.msra.mxu0 0
    %144 = vmatprep.subr.bf16.mxu0 0
    %145 = vmatpush1.bf16.msra.mxu0 0
    %146 = vmatprep.subr.bf16.mxu0 0
    %147 = vmatpush1.bf16.msra.mxu0 0
    %148 = vmatprep.subr.bf16.mxu0 0
    %149 = vmatpush1.bf16.msra.mxu0 0
    %150 = vmatprep.subr.bf16.mxu0 0
    %151 = vmatpush1.bf16.msra.mxu0 0
    %152 = vmatprep.subr.bf16.mxu0 %v138
    %153 = vmatpush1.bf16.msra.mxu0 %v135
    %154 = vmatprep.subr.bf16.mxu0 %v122
    %155 = vmatpush1.bf16.msra.mxu0 %v121
    %156 = vmatprep.subr.bf16.mxu0 0
    %157 = vmatpush2.bf16.msra.mxu0 0
    %158 = vmatprep.subr.bf16.mxu0 0
    %159 = vmatpush2.bf16.msra.mxu0 0
    %160 = vmatprep.subr.bf16.mxu0 0
    %161 = vmatpush2.bf16.msra.mxu0 0
    %162 = vmatprep.subr.bf16.mxu0 0
    %163 = vmatpush2.bf16.msra.mxu0 0
    %164 = vmatprep.subr.bf16.mxu0 0
    %165 = vmatpush2.bf16.msra.mxu0 0
    %166 = vmatprep.subr.bf16.mxu0 0
    %167 = vmatpush2.bf16.msra.mxu0 0
    %168 = vmatprep.subr.bf16.mxu0 0
    %169 = vmatpush2.bf16.msra.mxu0 0
    %170 = vmatprep.subr.bf16.mxu0 0
    %171 = vmatpush2.bf16.msra.mxu0 0
    %172 = vmatprep.mubr.bf16.mxu0 0
    %173 = vmatmul.mubr.bf16.gmra.mxu0 %v129
    %v174 = vpop.f32.mrf.mxu0
    %v175 = vadd.f32 %v105, %v174
    %v176 = vpop.f32.mrf.mxu0
    %v177 = vadd.f32 %v109, %v176
    %v178 = vpop.f32.mrf.mxu0
    %v179 = vadd.f32 %v105, %v178
    %v180 = vpop.f32.mrf.mxu0
    %v181 = vadd.f32 %v109, %v180
    %182 = vdwg.mxu0
    %v183 = vmax.f32 %v175, 0.0
    %v184 = vmax.f32 %v177, 0.0
    %v185 = vmax.f32 %v179, 0.0
    %v186 = vmax.f32 %v181, 0.0
    %v187 = vpack.c.bf16 %v185, %v183
    %v188 = vpack.c.bf16 %v186, %v184
    %v189 = vld [vmem:[#allocation8] sm:$0xff]
    %v190 = vld [vmem:[#allocation8 + $0x8] sm:$0xff]
    %v191 = vld [vmem:[#allocation8 + $0x10] sm:$0xff]
    %v192 = vld [vmem:[#allocation8 + $0x18] sm:$0xff]
    %v193 = vld [vmem:[#allocation8 + $0x20] sm:$0xff]
    %v194 = vld [vmem:[#allocation8 + $0x28] sm:$0xff]
    %v195 = vld [vmem:[#allocation8 + $0x30] sm:$0xff]
    %v196 = vld [vmem:[#allocation8 + $0x38] sm:$0xff]
    %v197 = vld [vmem:[#allocation8 + $0x40] sm:$0xff]
    %v198 = vld [vmem:[#allocation8 + $0x48] sm:$0xff]
    %v199 = vld [vmem:[#allocation8 + $0x50] sm:$0xff]
    %v200 = vld [vmem:[#allocation8 + $0x58] sm:$0xff]
    %v201 = vld [vmem:[#allocation8 + $0x60] sm:$0xff]
    %v202 = vld [vmem:[#allocation8 + $0x68] sm:$0xff]
    %v203 = vld [vmem:[#allocation8 + $0x70] sm:$0xff]
    %v204 = vld [vmem:[#allocation8 + $0x78] sm:$0xff]
    %v205 = vld [vmem:[#allocation8 + $0x80] sm:$0xff]
    %v206 = vld [vmem:[#allocation8 + $0x88] sm:$0xff]
    %v207 = vld [vmem:[#allocation8 + $0x90] sm:$0xff]
    %v208 = vld [vmem:[#allocation8 + $0x98] sm:$0xff]
    %v209 = vld [vmem:[#allocation8 + $0xa0] sm:$0xff]
    %v210 = vld [vmem:[#allocation8 + $0xa8] sm:$0xff]
    %v211 = vld [vmem:[#allocation8 + $0xb0] sm:$0xff]
    %v212 = vld [vmem:[#allocation8 + $0xb8] sm:$0xff]
    %v213 = vld [vmem:[#allocation8 + $0xc0] sm:$0xff]
    %v214 = vld [vmem:[#allocation8 + $0xc8] sm:$0xff]
    %v215 = vld [vmem:[#allocation8 + $0xd0] sm:$0xff]
    %v216 = vld [vmem:[#allocation8 + $0xd8] sm:$0xff]
    %v217 = vld [vmem:[#allocation8 + $0xe0] sm:$0xff]
    %v218 = vld [vmem:[#allocation8 + $0xe8] sm:$0xff]
    %v219 = vld [vmem:[#allocation8 + $0xf0] sm:$0xff]
    %v220 = vld [vmem:[#allocation8 + $0xf8] sm:$0xff]
    %v221 = vld [vmem:[%s4] sm:$0x3]
    %v223 = vlaneseq
    %v224 = vshrl.u32 %v223, 7
    %v225 = vsub.s32 0, %v224
    %v226 = vrot.slane %v221, %v225
    %v227 = vlaneseq
    %v228 = vshrl.u32 %v227, 7
    %v229 = vsub.s32 1, %v228
    %v230 = vrot.slane %v221, %v229
    %v265 = vunpack.c.l.b16 %v189
    %v266 = vunpack.c.h.b16 %v189
    %v267 = vunpack.c.l.b16 %v190
    %v268 = vunpack.c.h.b16 %v190
    %v269 = vunpack.c.l.b16 %v191
    %v270 = vunpack.c.h.b16 %v191
    %v271 = vunpack.c.l.b16 %v192
    %v272 = vunpack.c.h.b16 %v192
    %v273 = vunpack.c.l.b16 %v193
    %v274 = vunpack.c.h.b16 %v193
    %v275 = vunpack.c.l.b16 %v194
    %v276 = vunpack.c.h.b16 %v194
    %v277 = vunpack.c.l.b16 %v195
    %v278 = vunpack.c.h.b16 %v195
    %v279 = vunpack.c.l.b16 %v196
    %v280 = vunpack.c.h.b16 %v196
    %v281 = vunpack.c.l.b16 %v197
    %v282 = vunpack.c.h.b16 %v197
    %v283 = vunpack.c.l.b16 %v198
    %v284 = vunpack.c.h.b16 %v198
    %v285 = vunpack.c.l.b16 %v199
    %v286 = vunpack.c.h.b16 %v199
    %v287 = vunpack.c.l.b16 %v200
    %v288 = vunpack.c.h.b16 %v200
    %v289 = vunpack.c.l.b16 %v201
    %v290 = vunpack.c.h.b16 %v201
    %v291 = vunpack.c.l.b16 %v202
    %v292 = vunpack.c.h.b16 %v202
    %v293 = vunpack.c.l.b16 %v203
    %v294 = vunpack.c.h.b16 %v203
    %v295 = vunpack.c.l.b16 %v204
    %v296 = vunpack.c.h.b16 %v204
    %v297 = vunpack.c.l.b16 %v205
    %v298 = vunpack.c.h.b16 %v205
    %v299 = vunpack.c.l.b16 %v206
    %v300 = vunpack.c.h.b16 %v206
    %v301 = vunpack.c.l.b16 %v207
    %v302 = vunpack.c.h.b16 %v207
    %v303 = vunpack.c.l.b16 %v208
    %v304 = vunpack.c.h.b16 %v208
    %v305 = vunpack.c.l.b16 %v209
    %v306 = vunpack.c.h.b16 %v209
    %v307 = vunpack.c.l.b16 %v210
    %v308 = vunpack.c.h.b16 %v210
    %v309 = vunpack.c.l.b16 %v211
    %v310 = vunpack.c.h.b16 %v211
    %v311 = vunpack.c.l.b16 %v212
    %v312 = vunpack.c.h.b16 %v212
    %v313 = vunpack.c.l.b16 %v213
    %v314 = vunpack.c.h.b16 %v213
    %v315 = vunpack.c.l.b16 %v214
    %v316 = vunpack.c.h.b16 %v214
    %v317 = vunpack.c.l.b16 %v215
    %v318 = vunpack.c.h.b16 %v215
    %v319 = vunpack.c.l.b16 %v216
    %v320 = vunpack.c.h.b16 %v216
    %v321 = vunpack.c.l.b16 %v217
    %v322 = vunpack.c.h.b16 %v217
    %v323 = vunpack.c.l.b16 %v218
    %v324 = vunpack.c.h.b16 %v218
    %v325 = vunpack.c.l.b16 %v219
    %v326 = vunpack.c.h.b16 %v219
    %v327 = vunpack.c.l.b16 %v220
    %v328 = vunpack.c.h.b16 %v220
    %v329 = vpack.c.b16 %v267, %v265
    %v330 = vpack.c.b16 %v268, %v266
    %v331 = vpack.c.b16 %v271, %v269
    %v332 = vpack.c.b16 %v272, %v270
    %v333 = vpack.c.b16 %v275, %v273
    %v334 = vpack.c.b16 %v276, %v274
    %v335 = vpack.c.b16 %v279, %v277
    %v336 = vpack.c.b16 %v280, %v278
    %v337 = vpack.c.b16 %v283, %v281
    %v338 = vpack.c.b16 %v284, %v282
    %v339 = vpack.c.b16 %v287, %v285
    %v340 = vpack.c.b16 %v288, %v286
    %v341 = vpack.c.b16 %v291, %v289
    %v342 = vpack.c.b16 %v292, %v290
    %v343 = vpack.c.b16 %v295, %v293
    %v344 = vpack.c.b16 %v296, %v294
    %v345 = vpack.c.b16 %v299, %v297
    %v346 = vpack.c.b16 %v300, %v298
    %v347 = vpack.c.b16 %v303, %v301
    %v348 = vpack.c.b16 %v304, %v302
    %v349 = vpack.c.b16 %v307, %v305
    %v350 = vpack.c.b16 %v308, %v306
    %v351 = vpack.c.b16 %v311, %v309
    %v352 = vpack.c.b16 %v312, %v310
    %v353 = vpack.c.b16 %v315, %v313
    %v354 = vpack.c.b16 %v316, %v314
    %v355 = vpack.c.b16 %v319, %v317
    %v356 = vpack.c.b16 %v320, %v318
    %v357 = vpack.c.b16 %v323, %v321
    %v358 = vpack.c.b16 %v324, %v322
    %v359 = vpack.c.b16 %v327, %v325
    %v360 = vpack.c.b16 %v328, %v326
    %393 = vmatprep.subr.bf16.mxu0 %v344
    %394 = vmatpush1.bf16.msra.mxu0 %v343
    %395 = vmatprep.subr.bf16.mxu0 %v342
    %396 = vmatpush1.bf16.msra.mxu0 %v341
    %397 = vmatprep.subr.bf16.mxu0 %v340
    %398 = vmatpush1.bf16.msra.mxu0 %v339
    %399 = vmatprep.subr.bf16.mxu0 %v338
    %400 = vmatpush1.bf16.msra.mxu0 %v337
    %401 = vmatprep.subr.bf16.mxu0 %v336
    %402 = vmatpush1.bf16.msra.mxu0 %v335
    %403 = vmatprep.subr.bf16.mxu0 %v334
    %404 = vmatpush1.bf16.msra.mxu0 %v333
    %405 = vmatprep.subr.bf16.mxu0 %v332
    %406 = vmatpush1.bf16.msra.mxu0 %v331
    %407 = vmatprep.subr.bf16.mxu0 %v330
    %408 = vmatpush1.bf16.msra.mxu0 %v329
    %409 = vmatprep.subr.bf16.mxu0 %v360
    %410 = vmatpush2.bf16.msra.mxu0 %v359
    %411 = vmatprep.subr.bf16.mxu0 %v358
    %412 = vmatpush2.bf16.msra.mxu0 %v357
    %413 = vmatprep.subr.bf16.mxu0 %v356
    %414 = vmatpush2.bf16.msra.mxu0 %v355
    %415 = vmatprep.subr.bf16.mxu0 %v354
    %416 = vmatpush2.bf16.msra.mxu0 %v353
    %417 = vmatprep.subr.bf16.mxu0 %v352
    %418 = vmatpush2.bf16.msra.mxu0 %v351
    %419 = vmatprep.subr.bf16.mxu0 %v350
    %420 = vmatpush2.bf16.msra.mxu0 %v349
    %421 = vmatprep.subr.bf16.mxu0 %v348
    %422 = vmatpush2.bf16.msra.mxu0 %v347
    %423 = vmatprep.subr.bf16.mxu0 %v346
    %424 = vmatpush2.bf16.msra.mxu0 %v345
    %425 = vmatprep.mubr.bf16.mxu0 %v188
    %426 = vmatmul.mubr.bf16.gmra.mxu0 %v187
    %v427 = vpop.f32.mrf.mxu0
    %v428 = vadd.f32 %v226, %v427
    %v429 = vpop.f32.mrf.mxu0
    %v430 = vadd.f32 %v230, %v429
    %v431 = vpop.f32.mrf.mxu0
    %v432 = vadd.f32 %v226, %v431
    %v433 = vpop.f32.mrf.mxu0
    %v434 = vadd.f32 %v230, %v433
    %435 = vdwg.mxu0
    %v436 = vmax.f32 %v428, 0.0
    %v437 = vmax.f32 %v430, 0.0
    %v438 = vmax.f32 %v432, 0.0
    %v439 = vmax.f32 %v434, 0.0
    %v440 = vpack.c.bf16 %v438, %v436
    %v441 = vpack.c.bf16 %v439, %v437
    %v442 = vld [vmem:[#allocation10] sm:$0xf]
    %v443 = vld [vmem:[#allocation10 + $0x4] sm:$0xf]
    %v444 = vld [vmem:[#allocation10 + $0x8] sm:$0xf]
    %v445 = vld [vmem:[#allocation10 + $0xc] sm:$0xf]
    %v446 = vld [vmem:[#allocation10 + $0x10] sm:$0xf]
    %v447 = vld [vmem:[#allocation10 + $0x14] sm:$0xf]
    %v448 = vld [vmem:[#allocation10 + $0x18] sm:$0xf]
    %v449 = vld [vmem:[#allocation10 + $0x1c] sm:$0xf]
    %v450 = vld [vmem:[#allocation10 + $0x20] sm:$0xf]
    %v451 = vld [vmem:[#allocation10 + $0x24] sm:$0xf]
    %v452 = vld [vmem:[#allocation10 + $0x28] sm:$0xf]
    %v453 = vld [vmem:[#allocation10 + $0x2c] sm:$0xf]
    %v454 = vld [vmem:[#allocation10 + $0x30] sm:$0xf]
    %v455 = vld [vmem:[#allocation10 + $0x34] sm:$0xf]
    %v456 = vld [vmem:[#allocation10 + $0x38] sm:$0xf]
    %v457 = vld [vmem:[#allocation10 + $0x3c] sm:$0xf]
    %v458 = vld [vmem:[#allocation10 + $0x40] sm:$0xf]
    %v459 = vld [vmem:[#allocation10 + $0x44] sm:$0xf]
    %v460 = vld [vmem:[#allocation10 + $0x48] sm:$0xf]
    %v461 = vld [vmem:[#allocation10 + $0x4c] sm:$0xf]
    %v462 = vld [vmem:[#allocation10 + $0x50] sm:$0xf]
    %v463 = vld [vmem:[#allocation10 + $0x54] sm:$0xf]
    %v464 = vld [vmem:[#allocation10 + $0x58] sm:$0xf]
    %v465 = vld [vmem:[#allocation10 + $0x5c] sm:$0xf]
    %v466 = vld [vmem:[#allocation10 + $0x60] sm:$0xf]
    %v467 = vld [vmem:[#allocation10 + $0x64] sm:$0xf]
    %v468 = vld [vmem:[#allocation10 + $0x68] sm:$0xf]
    %v469 = vld [vmem:[#allocation10 + $0x6c] sm:$0xf]
    %v470 = vld [vmem:[#allocation10 + $0x70] sm:$0xf]
    %v471 = vld [vmem:[#allocation10 + $0x74] sm:$0xf]
    %v472 = vld [vmem:[#allocation10 + $0x78] sm:$0xf]
    %v473 = vld [vmem:[#allocation10 + $0x7c] sm:$0xf]
    %v474 = vld [vmem:[%s6] sm:$0x1]
    %v476 = vlaneseq
    %v477 = vshrl.u32 %v476, 7
    %v478 = vsub.s32 0, %v477
    %v479 = vrot.slane %v474, %v478
    %v513 = vunpack.c.l.b16 %v442
    %v514 = vunpack.c.l.b16 %v443
    %v515 = vunpack.c.l.b16 %v444
    %v516 = vunpack.c.l.b16 %v445
    %v517 = vunpack.c.l.b16 %v446
    %v518 = vunpack.c.l.b16 %v447
    %v519 = vunpack.c.l.b16 %v448
    %v520 = vunpack.c.l.b16 %v449
    %v521 = vunpack.c.l.b16 %v450
    %v522 = vunpack.c.l.b16 %v451
    %v523 = vunpack.c.l.b16 %v452
    %v524 = vunpack.c.l.b16 %v453
    %v525 = vunpack.c.l.b16 %v454
    %v526 = vunpack.c.l.b16 %v455
    %v527 = vunpack.c.l.b16 %v456
    %v528 = vunpack.c.l.b16 %v457
    %v529 = vunpack.c.l.b16 %v458
    %v530 = vunpack.c.l.b16 %v459
    %v531 = vunpack.c.l.b16 %v460
    %v532 = vunpack.c.l.b16 %v461
    %v533 = vunpack.c.l.b16 %v462
    %v534 = vunpack.c.l.b16 %v463
    %v535 = vunpack.c.l.b16 %v464
    %v536 = vunpack.c.l.b16 %v465
    %v537 = vunpack.c.l.b16 %v466
    %v538 = vunpack.c.l.b16 %v467
    %v539 = vunpack.c.l.b16 %v468
    %v540 = vunpack.c.l.b16 %v469
    %v541 = vunpack.c.l.b16 %v470
    %v542 = vunpack.c.l.b16 %v471
    %v543 = vunpack.c.l.b16 %v472
    %v544 = vunpack.c.l.b16 %v473
    %v545 = vpack.c.b16 %v514, %v513
    %v546 = vpack.c.b16 %v516, %v515
    %v547 = vpack.c.b16 %v518, %v517
    %v548 = vpack.c.b16 %v520, %v519
    %v549 = vpack.c.b16 %v522, %v521
    %v550 = vpack.c.b16 %v524, %v523
    %v551 = vpack.c.b16 %v526, %v525
    %v552 = vpack.c.b16 %v528, %v527
    %v553 = vpack.c.b16 %v530, %v529
    %v554 = vpack.c.b16 %v532, %v531
    %v555 = vpack.c.b16 %v534, %v533
    %v556 = vpack.c.b16 %v536, %v535
    %v557 = vpack.c.b16 %v538, %v537
    %v558 = vpack.c.b16 %v540, %v539
    %v559 = vpack.c.b16 %v542, %v541
    %v560 = vpack.c.b16 %v544, %v543
    %577 = vmatprep.subr.bf16.mxu0 0
    %578 = vmatpush1.bf16.msra.mxu0 %v552
    %579 = vmatprep.subr.bf16.mxu0 0
    %580 = vmatpush1.bf16.msra.mxu0 %v551
    %581 = vmatprep.subr.bf16.mxu0 0
    %582 = vmatpush1.bf16.msra.mxu0 %v550
    %583 = vmatprep.subr.bf16.mxu0 0
    %584 = vmatpush1.bf16.msra.mxu0 %v549
    %585 = vmatprep.subr.bf16.mxu0 0
    %586 = vmatpush1.bf16.msra.mxu0 %v548
    %587 = vmatprep.subr.bf16.mxu0 0
    %588 = vmatpush1.bf16.msra.mxu0 %v547
    %589 = vmatprep.subr.bf16.mxu0 0
    %590 = vmatpush1.bf16.msra.mxu0 %v546
    %591 = vmatprep.subr.bf16.mxu0 0
    %592 = vmatpush1.bf16.msra.mxu0 %v545
    %593 = vmatprep.subr.bf16.mxu0 0
    %594 = vmatpush2.bf16.msra.mxu0 %v560
    %595 = vmatprep.subr.bf16.mxu0 0
    %596 = vmatpush2.bf16.msra.mxu0 %v559
    %597 = vmatprep.subr.bf16.mxu0 0
    %598 = vmatpush2.bf16.msra.mxu0 %v558
    %599 = vmatprep.subr.bf16.mxu0 0
    %600 = vmatpush2.bf16.msra.mxu0 %v557
    %601 = vmatprep.subr.bf16.mxu0 0
    %602 = vmatpush2.bf16.msra.mxu0 %v556
    %603 = vmatprep.subr.bf16.mxu0 0
    %604 = vmatpush2.bf16.msra.mxu0 %v555
    %605 = vmatprep.subr.bf16.mxu0 0
    %606 = vmatpush2.bf16.msra.mxu0 %v554
    %607 = vmatprep.subr.bf16.mxu0 0
    %608 = vmatpush2.bf16.msra.mxu0 %v553
    %609 = vmatprep.mubr.bf16.mxu0 %v441
    %610 = vmatmul.mubr.bf16.gmra.mxu0 %v440
    %v611 = vpop.f32.mrf.mxu0
    %v612 = vadd.f32 %v479, %v611
    %v613 = vpop.f32.mrf.mxu0
    %v614 = vpop.f32.mrf.mxu0
    %v615 = vadd.f32 %v479, %v614
    %v616 = vpop.f32.mrf.mxu0
    %617 = vdwg.mxu0
    %v618 = vpack.c.bf16 %v615, %v612
    %v620 = vunpack.c.l.b16 %v618
    %v621 = vunpack.c.h.b16 %v618
    %v622 = vpack.c.b16 %v620, %v620
    %v623 = vpack.c.b16 %v621, %v621
    %626 = vst [vmem:[#allocation11] sm:$0xf] %v622
    %627 = vst [vmem:[#allocation11 + $0x4] sm:$0xf] %v623
    // Predicated region
    $region50: #{_policy_forward_padded.1} parent=1 // pred_check
      _
    $region51: #{_policy_forward_padded.1} parent=1 // pred_check_branch
      %629 = sbr.rel (0) target = $region53
    $region52: #{_policy_forward_padded.1} parent=1 // pred_region
      %s631 = ssub.s32 128, 128
      %632 = vsyncadd [#allocation4], %s631
      %s633 = sshll.u32 [#allocation11], 4
      %s634 = int_to_ptr.vmem [resolvable:$true] %s633
      %639 = dma.vmem_to_hbm [thread:$0]  %s634, 128, %s7, [#allocation4], 64, 64, 4
    $region53: #{_policy_forward_padded.1} parent=1 // pred_fallthru
      _
    // Predicated region
    $region54: #{_policy_forward_padded.1} parent=1 // pred_check
      _
    $region55: #{_policy_forward_padded.1} parent=1 // pred_check_branch
      %641 = sbr.rel (0) target = $region57
    $region56: #{_policy_forward_padded.1} parent=1 // pred_region
      %642 = dma.done [#allocation4], 128
    $region57: #{_policy_forward_padded.1} parent=1 // pred_fallthru
      _
    %643 = vsyncpa [#allocation3], 1
    %644 = vsyncpa [#allocation6], 1
    %645 = vsyncpa [#allocation9], 1
    %646 = vsyncpa [#allocation4], 1

</llo_original>
